<compile_context>
chip_gen: v7x
topology: tpu7x:2x2x1
jax: 0.10.0
libtpu: 0.0.40
codegen_flags: <defaults>
</compile_context>

<pallas_src>
import functools

import jax
import jax.numpy as jnp
from jax.experimental import pallas as pl
from jax.experimental.pallas import tpu as pltpu

T1 = 0.1
T2 = -0.1

_LANE = 128
_SMALL_BYTES = 2 << 20           # <= 2 MiB: gridless whole-array VMEM path
_TARGET_BLOCK_BYTES = 2 << 20    # ~2 MiB per (rb, 128) tile on the tiled path
                                 # (in+out double-buffered = 8 MiB scoped VMEM,
                                 #  safe on v5e/v6e/v7x default limits)


def _clamp_scale_shift_kernel(x_ref, o_ref, *, x_min, x_max, t1, t2):
    x = x_ref[...]
    # 4 VPU ops on lane-dense vregs: max, min, mul, add.  Scalars are Python
    # floats -> folded as immediates, no broadcast materialization.
    v1 = jnp.minimum(jnp.maximum(x, x_min), x_max)
    o_ref[...] = v1 * t1 + t2


def _pick_row_block(rows, cols, itemsize):
    """Rows per tile for the streaming path.

    Targets ~_TARGET_BLOCK_BYTES per block, rounds to a multiple of 8 sublanes,
    and (when possible) keeps the grid length even so 'parallel' semantics
    split work evenly across v7x's two TensorCores.
    """
    rb = max(8, _TARGET_BLOCK_BYTES // max(1, cols * itemsize))
    rb = min(rb, rows)
    rb = max(8, (rb // 8) * 8)
    n = -(-rows // rb)
    if n > 1 and n % 2 == 1:
        n += 1
        rb = max(8, ((-(-rows // n) + 7) // 8) * 8)
    return rb


def model_forward(x1, x1_max=100.0, x1_min=-100.0, t1=T1, t2=T2,
                  *, alias_input=False):
    """Returns clamp(x1, x1_min, x1_max) * t1 + t2 for a float array x1.

    alias_input=True reuses x1's buffer for the output; the caller must donate
    x1 and it is only applied when no lane-padding copy was needed.
    """
    orig_shape = x1.shape
    total = x1.size
    itemsize = x1.dtype.itemsize

    kernel = functools.partial(_clamp_scale_shift_kernel,
                               x_min=x1_min, x_max=x1_max, t1=t1, t2=t2)

    # Lane-dense (rows, 128) view.  Row-major reshape of a contiguous array is
    # metadata-only; if the element count is not a multiple of 128 we pad the
    # flattened view (pad values are clamped/scaled harmlessly and sliced off
    # afterwards) so every vld/vst stays full-width and unmasked.
    if total % _LANE != 0:
        padded = ((total + _LANE - 1) // _LANE) * _LANE
        flat = jnp.pad(x1.reshape(-1), (0, padded - total))
    else:
        padded = total
        flat = x1.reshape(-1)
    x2d = flat.reshape(padded // _LANE, _LANE)

    rows, cols = x2d.shape
    nbytes = padded * itemsize
    aliases = {0: 0} if (alias_input and padded == total) else {}

    if nbytes <= _SMALL_BYTES:
        # Single whole-array block resident in VMEM: no grid, no pipeline.
        out2d = pl.pallas_call(
            kernel,
            out_shape=jax.ShapeDtypeStruct((rows, cols), x1.dtype),
            in_specs=[pl.BlockSpec(memory_space=pltpu.MemorySpace.VMEM)],
            out_specs=pl.BlockSpec(memory_space=pltpu.MemorySpace.VMEM),
            input_output_aliases=aliases,
        )(x2d)
    else:
        # Streaming path: ~2 MiB lane-dense row tiles on a 'parallel' axis
        # (shards across TensorCores on v7x; harmless on v5e/v6e).
        rb = _pick_row_block(rows, cols, itemsize)
        out2d = pl.pallas_call(
            kernel,
            out_shape=jax.ShapeDtypeStruct((rows, cols), x1.dtype),
            grid=(pl.cdiv(rows, rb),),
            in_specs=[pl.BlockSpec((rb, cols), lambda i: (i, 0))],
            out_specs=pl.BlockSpec((rb, cols), lambda i: (i, 0)),
            input_output_aliases=aliases,
            compiler_params=pltpu.CompilerParams(
                dimension_semantics=("parallel",),
            ),
        )(x2d)

    out_flat = out2d.reshape(-1)
    if padded != total:
        out_flat = out_flat[:total]
    return out_flat.reshape(orig_shape)


if __name__ == "__main__":
    k0, k1 = jax.random.split(jax.random.PRNGKey(0))

    # Reference input shape from the module: torch.randn(1, 32, 32).
    x1 = jax.random.normal(k0, (1, 32, 32), dtype=jnp.float32)
    ref1 = jnp.clip(x1, -100.0, 100.0) * T1 + T2
    out1 = jax.block_until_ready(model_forward(x1))
    assert out1.shape == (1, 32, 32)
    assert jnp.allclose(out1, ref1, atol=1e-6), "mismatch vs reference (small path)"

    # Exercise the lane-padding fallback (element count not a multiple of 128).
    x2 = jax.random.normal(k1, (2, 3, 50), dtype=jnp.float32)
    ref2 = jnp.clip(x2, -100.0, 100.0) * T1 + T2
    out2 = jax.block_until_ready(model_forward(x2))
    assert out2.shape == (2, 3, 50)
    assert jnp.allclose(out2, ref2, atol=1e-6), "mismatch vs reference (padded path)"

    print("KERNEL_OK")
</pallas_src>

<mosaic_0001>
module attributes {stable_mosaic.version = 11 : i64} {
  func.func @_clamp_scale_shift_kernel(%arg0: memref<8x128xf32, #tpu.memory_space<vmem>>, %arg1: memref<8x128xf32, #tpu.memory_space<vmem>>) attributes {dimension_semantics = [], scalar_prefetch = 0 : i64, scratch_operands = 0 : i64, tpu.core_type = #tpu.core_type<tc>} {
    %c0 = arith.constant 0 : index
    %c0_0 = arith.constant 0 : index
    %0 = vector.load %arg0[%c0, %c0_0] : memref<8x128xf32, #tpu.memory_space<vmem>>, vector<8x128xf32>
    %cst = arith.constant -1.000000e+02 : f32
    %1 = vector.broadcast %cst : f32 to vector<8x128xf32>
    %2 = arith.maximumf %0, %1 : vector<8x128xf32>
    %cst_1 = arith.constant 1.000000e+02 : f32
    %3 = vector.broadcast %cst_1 : f32 to vector<8x128xf32>
    %4 = arith.minimumf %2, %3 : vector<8x128xf32>
    %cst_2 = arith.constant 1.000000e-01 : f32
    %5 = vector.broadcast %cst_2 : f32 to vector<8x128xf32>
    %6 = arith.mulf %4, %5 : vector<8x128xf32>
    %cst_3 = arith.constant -1.000000e-01 : f32
    %7 = vector.broadcast %cst_3 : f32 to vector<8x128xf32>
    %8 = arith.addf %6, %7 : vector<8x128xf32>
    %c0_4 = arith.constant 0 : index
    %c0_5 = arith.constant 0 : index
    %9 = vector.load %arg1[%c0_4, %c0_5] : memref<8x128xf32, #tpu.memory_space<vmem>>, vector<8x128xf32>
    tpu.vector_store %arg1[%c0_4, %c0_5], %8 {strides = array<i32>} : memref<8x128xf32, #tpu.memory_space<vmem>>, vector<8x128xf32>,
    return
  }
}

</mosaic_0001>

<llo_original>
// kernel: tpu_custom_call.1
$region0: #{tpu_custom_call.1}
  #allocation0 [shape = 'u32[]', space=smem, size = 0x4, offset = 0x4, fixed_abs, tag = 'smem constant byte address 0x4 - core index']
  #allocation1 [shape = 'u32[144,128]{1,0:T(1,128)}', space=vmem, size = 0x12000, scoped, tag = 'internal scratch']
  %s0 = inlined_call_operand.hbm [shape: f32[8,128], index: 0, kind: input, shape index: {}]
  %s1 = inlined_call_operand.hbm [shape: f32[8,128], index: 1, kind: output, shape index: {}]
  %s2 = sld [smem:[#allocation0]]
  $region18: #{tpu_custom_call.1} parent=0
    _
  %s4 = ssub.s32 1, %s2
  %s5 = scalar_select 0, %s4, %s2
  $region1: #{tpu_custom_call.1} parent=0
    #allocation2 [shape = 'u8[4096]{0}', space=vmem, size = 0x1000, scoped, tag = 'input window, operand 0, single buffered']
    #allocation3 [shape = 's32[1]{0}', space=sflag, size = 0x4, scoped, tag = 'scoped memory for tpu_custom_call.1']
    #allocation4 [shape = 's32[1]{0}', space=sflag, size = 0x4, scoped, tag = 'scoped memory for tpu_custom_call.1']
    #allocation5 [shape = 'u8[4096]{0}', space=vmem, size = 0x1000, scoped, tag = 'output window, operand 0, single buffered']
    %6 = vsyncpa [#allocation3], 0
    %7 = vsyncpa [#allocation4], 0
    // Predicated region
    $region2: #{tpu_custom_call.1} parent=1 // pred_check
      _
    $region3: #{tpu_custom_call.1} parent=1 // pred_check_branch
      %9 = sbr.rel (0) target = $region5
    $region4: #{tpu_custom_call.1} parent=1 // pred_region
      %s11 = ssub.s32 128, 128
      %12 = vsyncadd [#allocation3], %s11
      %s14 = sshll.u32 [#allocation2], 4
      %s15 = int_to_ptr.vmem [resolvable:$true] %s14
      %17 = dma.hbm_to_vmem [thread:$0]  %s0, 128, %s15, [#allocation3]
    $region5: #{tpu_custom_call.1} parent=1 // pred_fallthru
      _
    // Predicated region
    $region6: #{tpu_custom_call.1} parent=1 // pred_check
      _
    $region7: #{tpu_custom_call.1} parent=1 // pred_check_branch
      %19 = sbr.rel (0) target = $region9
    $region8: #{tpu_custom_call.1} parent=1 // pred_region
      %20 = dma.done [#allocation3], 128
    $region9: #{tpu_custom_call.1} parent=1 // pred_fallthru
      _
    %v21 = vld [vmem:[#allocation2] sm:$0xff]
    %v22 = vmax.f32 %v21, -100.0
    %v23 = vmin.f32 %v22, 100.0
    %v24 = vmul.f32 %v23, 0.1
    %v25 = vadd.f32 %v24, -0.1
    %26 = vst [vmem:[#allocation5] sm:$0xff] %v25
    // Predicated region
    $region10: #{tpu_custom_call.1} parent=1 // pred_check
      _
    $region11: #{tpu_custom_call.1} parent=1 // pred_check_branch
      %28 = sbr.rel (0) target = $region13
    $region12: #{tpu_custom_call.1} parent=1 // pred_region
      %s30 = ssub.s32 128, 128
      %31 = vsyncadd [#allocation4], %s30
      %s33 = sshll.u32 [#allocation5], 4
      %s34 = int_to_ptr.vmem [resolvable:$true] %s33
      %36 = dma.vmem_to_hbm [thread:$0]  %s34, 128, %s1, [#allocation4]
    $region13: #{tpu_custom_call.1} parent=1 // pred_fallthru
      _
    // Predicated region
    $region14: #{tpu_custom_call.1} parent=1 // pred_check
      _
    $region15: #{tpu_custom_call.1} parent=1 // pred_check_branch
      %38 = sbr.rel (0) target = $region17
    $region16: #{tpu_custom_call.1} parent=1 // pred_region
      %39 = dma.done [#allocation4], 128
    $region17: #{tpu_custom_call.1} parent=1 // pred_fallthru
      _
    %40 = vsyncpa [#allocation3], 1
    %41 = vsyncpa [#allocation4], 1

</llo_original>
